<compile_context>
chip_gen: v5e
topology: v5e:2x2
jax: 0.10.0
libtpu: 0.0.40
codegen_flags: <defaults>
</compile_context>

<pallas_src>
import jax
import jax.numpy as jnp
import numpy as np
from jax.experimental import pallas as pl
from jax.experimental.pallas import tpu as pltpu


def _smooth_l1(a, b):
    # torch.nn.functional.smooth_l1_loss(reduction='none'), default beta = 1.0
    d = a - b
    ad = jnp.abs(d)
    return jnp.where(ad < 1.0, 0.5 * d * d, ad - 0.5)


def _tv_kernel(img_ref, valid_ref, unc_ref, out_ref):
    # img_ref:   (1, C, H, W)  all channels of one batch element
    # valid_ref: (1, H, W)     validity plane shared by all channels
    # unc_ref:   (1, H, W)     uncertainty plane shared by all channels
    # out_ref:   (1, 6, W)     lane-oriented per-batch partial sums:
    #   row 0: sum_h up_valid              row 3: sum_h left_valid (lane W-1 = 0)
    #   row 1: sum_h up_unc * up_wdiff     row 4: sum_h left_unc * left_wdiff
    #   row 2: sum_h up_wdiff              row 5: sum_h left_wdiff
    # (wdiff = channel-summed smooth-L1 * valid; channel factor for the valid
    #  counts is applied in the wrapper.)
    img = img_ref[0].astype(jnp.float32)            # (C, H, W), cast in VMEM
    v = valid_ref[0].astype(jnp.float32)            # (H, W)
    su = jnp.sqrt(unc_ref[0].astype(jnp.float32))   # (H, W); single EUP sqrt/plane

    # --- "up": differences along H (sublane axis) ---
    sl1_u = jnp.sum(_smooth_l1(img[:, 1:, :], img[:, :-1, :]), axis=0)  # (H-1, W)
    valid_u = v[1:, :] * v[:-1, :]                                      # (H-1, W)
    unc_u = su[1:, :] * su[:-1, :]
    raw_u = sl1_u * valid_u

    # --- "left": differences along W (lane axis) ---
    sl1_l = jnp.sum(_smooth_l1(img[:, :, 1:], img[:, :, :-1]), axis=0)  # (H, W-1)
    valid_l = v[:, 1:] * v[:, :-1]
    unc_l = su[:, 1:] * su[:, :-1]
    raw_l = sl1_l * valid_l

    zpad = jnp.zeros((1, 1), jnp.float32)

    def row(x):    # (H', W) -> (1, W): reduce over rows only, keep lanes
        return jnp.sum(x, axis=0, keepdims=True)

    def rowp(x):   # (H', W-1) -> (1, W): reduce over rows, zero-pad last lane
        return jnp.concatenate([jnp.sum(x, axis=0, keepdims=True), zpad], axis=1)

    out_ref[0] = jnp.concatenate(
        [row(valid_u), row(unc_u * raw_u), row(raw_u),
         rowp(valid_l), rowp(unc_l * raw_l), rowp(raw_l)], axis=0)


@jax.jit
def tv_loss(img, valid_mask, unc_scale):
    """Pallas implementation of TVLoss.forward.

    img:        (B, C, H, W)
    valid_mask: broadcastable to (B, 1, H, W)  (channel-shared, as in the module)
    unc_scale:  broadcastable to (B, 1, H, W)
    Returns (loss, raw_loss) scalars.
    """
    B, C, H, W = img.shape
    # Keep the mask / uncertainty planes un-broadcast across channels; the
    # kernel reuses one (H, W) plane per batch element for all C channels.
    v3 = jnp.broadcast_to(jnp.asarray(valid_mask), (B, 1, H, W)).reshape(B, H, W)
    u3 = jnp.broadcast_to(jnp.asarray(unc_scale), (B, 1, H, W)).reshape(B, H, W)

    cost = pl.CostEstimate(
        flops=20 * B * C * H * W,
        transcendentals=B * H * W,
        bytes_accessed=(img.size * jnp.dtype(img.dtype).itemsize
                        + (v3.size + u3.size) * jnp.dtype(v3.dtype).itemsize
                        + B * 6 * W * 4),
    )

    # NOTE: the pipeline holds 2 buffers of a full (C, H, W) block per step
    # (plus two (H, W) planes).  For very large C*H*W, tile H into row strips
    # with a 1-row halo; unnecessary at these shapes.
    partials = pl.pallas_call(
        _tv_kernel,
        out_shape=jax.ShapeDtypeStruct((B, 6, W), jnp.float32),
        grid=(B,),
        in_specs=[
            pl.BlockSpec((1, C, H, W), lambda b: (b, 0, 0, 0)),
            pl.BlockSpec((1, H, W), lambda b: (b, 0, 0)),
            pl.BlockSpec((1, H, W), lambda b: (b, 0, 0)),
        ],
        out_specs=pl.BlockSpec((1, 6, W), lambda b: (b, 0, 0)),
        compiler_params=pltpu.CompilerParams(
            dimension_semantics=("parallel",)),
        cost_estimate=cost,
    )(img, v3, u3)

    sums = jnp.sum(partials, axis=(0, 2))      # (6,) global partial sums
    up_valid_sum = C * sums[0]                 # mask plane shared by C channels
    lf_valid_sum = C * sums[3]

    up_numel = float(B * C * (H - 1) * W)
    lf_numel = float(B * C * H * (W - 1))
    up_div = jnp.maximum(up_valid_sum, up_numel / 2.0)
    lf_div = jnp.maximum(lf_valid_sum, lf_numel / 2.0)

    loss = sums[1] / up_div + sums[4] / lf_div
    raw_loss = sums[2] / up_div + sums[5] / lf_div
    return loss, raw_loss


def _tv_loss_ref(img, valid_mask, unc_scale):
    """Pure-JAX reference mirroring the PyTorch module, for validation."""
    img = img.astype(jnp.float32)
    v = jnp.broadcast_to(valid_mask, img.shape).astype(jnp.float32)
    u = jnp.broadcast_to(unc_scale, img.shape).astype(jnp.float32)

    up_diff = _smooth_l1(img[:, :, 1:], img[:, :, :-1])
    up_valid = v[:, :, 1:] * v[:, :, :-1]
    up_unc = jnp.sqrt(u[:, :, 1:] * u[:, :, :-1])
    lf_diff = _smooth_l1(img[:, :, :, 1:], img[:, :, :, :-1])
    lf_valid = v[:, :, :, 1:] * v[:, :, :, :-1]
    lf_unc = jnp.sqrt(u[:, :, :, 1:] * u[:, :, :, :-1])

    up_diff = up_diff * up_valid
    lf_diff = lf_diff * lf_valid
    up_div = jnp.maximum(jnp.sum(up_valid), up_valid.size / 2.0)
    lf_div = jnp.maximum(jnp.sum(lf_valid), lf_valid.size / 2.0)

    loss = jnp.sum(up_unc * up_diff) / up_div + jnp.sum(lf_unc * lf_diff) / lf_div
    raw = jnp.sum(up_diff) / up_div + jnp.sum(lf_diff) / lf_div
    return loss, raw


if __name__ == "__main__":
    key = jax.random.PRNGKey(0)
    k_img, k_mask, k_unc = jax.random.split(key, 3)

    B, C, H, W = 2, 4, 16, 16
    img = jax.random.normal(k_img, (B, C, H, W), dtype=jnp.float32)
    # valid_mask / unc_scale are (B, 1, H, W), shared across channels.
    valid_mask = (jax.random.uniform(k_mask, (B, 1, H, W)) > 0.2).astype(jnp.float32)
    unc_scale = jax.random.uniform(k_unc, (B, 1, H, W), minval=0.1, maxval=2.0)

    loss, raw_loss = tv_loss(img, valid_mask, unc_scale)
    jax.block_until_ready((loss, raw_loss))

    ref_loss, ref_raw = _tv_loss_ref(img, valid_mask, unc_scale)
    np.testing.assert_allclose(np.asarray(loss), np.asarray(ref_loss), rtol=1e-5, atol=1e-5)
    np.testing.assert_allclose(np.asarray(raw_loss), np.asarray(ref_raw), rtol=1e-5, atol=1e-5)

    print("KERNEL_OK")
</pallas_src>

<mosaic_0001>
module attributes {stable_mosaic.version = 11 : i64} {
  func.func @_tv_kernel(%arg0: i32, %arg1: memref<1x4x16x16xf32, #tpu.memory_space<vmem>>, %arg2: memref<1x16x16xf32, #tpu.memory_space<vmem>>, %arg3: memref<1x16x16xf32, #tpu.memory_space<vmem>>, %arg4: memref<1x6x16xf32, #tpu.memory_space<vmem>>) attributes {dimension_semantics = [#tpu.dimension_semantics<parallel>], iteration_bounds = array<i64: 2>, scalar_prefetch = 0 : i64, scratch_operands = 0 : i64, tpu.core_type = #tpu.core_type<tc>, window_params = [{transform_indices = @transform_0, window_bounds = array<i64: 1, 4, 16, 16>}, {transform_indices = @transform_1, window_bounds = array<i64: 1, 16, 16>}, {transform_indices = @transform_2, window_bounds = array<i64: 1, 16, 16>}, {transform_indices = @transform_3, window_bounds = array<i64: 1, 6, 16>}]} {
    %c0 = arith.constant 0 : index
    %c0_0 = arith.constant 0 : index
    %c0_1 = arith.constant 0 : index
    %c0_2 = arith.constant 0 : index
    %0 = vector.load %arg1[%c0, %c0_0, %c0_1, %c0_2] : memref<1x4x16x16xf32, #tpu.memory_space<vmem>>, vector<1x4x16x16xf32>
    %1 = vector.shape_cast %0 : vector<1x4x16x16xf32> to vector<4x16x16xf32>
    %c0_3 = arith.constant 0 : index
    %c0_4 = arith.constant 0 : index
    %c0_5 = arith.constant 0 : index
    %2 = vector.load %arg2[%c0_3, %c0_4, %c0_5] : memref<1x16x16xf32, #tpu.memory_space<vmem>>, vector<1x16x16xf32>
    %3 = vector.shape_cast %2 : vector<1x16x16xf32> to vector<16x16xf32>
    %c0_6 = arith.constant 0 : index
    %c0_7 = arith.constant 0 : index
    %c0_8 = arith.constant 0 : index
    %4 = vector.load %arg3[%c0_6, %c0_7, %c0_8] : memref<1x16x16xf32, #tpu.memory_space<vmem>>, vector<1x16x16xf32>
    %5 = vector.shape_cast %4 : vector<1x16x16xf32> to vector<16x16xf32>
    %6 = math.sqrt %5 : vector<16x16xf32>
    %7 = vector.extract_strided_slice %1 {offsets = [0, 1, 0], sizes = [4, 15, 16], strides = [1, 1, 1]} : vector<4x16x16xf32> to vector<4x15x16xf32>
    %8 = vector.extract_strided_slice %1 {offsets = [0, 0, 0], sizes = [4, 15, 16], strides = [1, 1, 1]} : vector<4x16x16xf32> to vector<4x15x16xf32>
    %9 = arith.subf %7, %8 : vector<4x15x16xf32>
    %10 = math.absf %9 : vector<4x15x16xf32>
    %cst = arith.constant 1.000000e+00 : f32
    %11 = vector.broadcast %cst : f32 to vector<4x15x16xf32>
    %12 = arith.cmpf olt, %10, %11 : vector<4x15x16xf32>
    %cst_9 = arith.constant 5.000000e-01 : f32
    %13 = vector.broadcast %cst_9 : f32 to vector<4x15x16xf32>
    %14 = arith.mulf %13, %9 : vector<4x15x16xf32>
    %15 = arith.mulf %14, %9 : vector<4x15x16xf32>
    %cst_10 = arith.constant 5.000000e-01 : f32
    %16 = vector.broadcast %cst_10 : f32 to vector<4x15x16xf32>
    %17 = arith.subf %10, %16 : vector<4x15x16xf32>
    %18 = arith.select %12, %15, %17 : vector<4x15x16xi1>, vector<4x15x16xf32>
    %cst_11 = arith.constant dense<0.000000e+00> : vector<15x16xf32>
    %19 = vector.multi_reduction <add>, %18, %cst_11 [0] : vector<4x15x16xf32> to vector<15x16xf32>
    %20 = vector.extract_strided_slice %3 {offsets = [1, 0], sizes = [15, 16], strides = [1, 1]} : vector<16x16xf32> to vector<15x16xf32>
    %21 = vector.extract_strided_slice %3 {offsets = [0, 0], sizes = [15, 16], strides = [1, 1]} : vector<16x16xf32> to vector<15x16xf32>
    %22 = arith.mulf %20, %21 : vector<15x16xf32>
    %23 = vector.extract_strided_slice %6 {offsets = [1, 0], sizes = [15, 16], strides = [1, 1]} : vector<16x16xf32> to vector<15x16xf32>
    %24 = vector.extract_strided_slice %6 {offsets = [0, 0], sizes = [15, 16], strides = [1, 1]} : vector<16x16xf32> to vector<15x16xf32>
    %25 = arith.mulf %23, %24 : vector<15x16xf32>
    %26 = arith.mulf %19, %22 : vector<15x16xf32>
    %27 = vector.extract_strided_slice %1 {offsets = [0, 0, 1], sizes = [4, 16, 15], strides = [1, 1, 1]} : vector<4x16x16xf32> to vector<4x16x15xf32>
    %28 = vector.extract_strided_slice %1 {offsets = [0, 0, 0], sizes = [4, 16, 15], strides = [1, 1, 1]} : vector<4x16x16xf32> to vector<4x16x15xf32>
    %29 = arith.subf %27, %28 : vector<4x16x15xf32>
    %30 = math.absf %29 : vector<4x16x15xf32>
    %cst_12 = arith.constant 1.000000e+00 : f32
    %31 = vector.broadcast %cst_12 : f32 to vector<4x16x15xf32>
    %32 = arith.cmpf olt, %30, %31 : vector<4x16x15xf32>
    %cst_13 = arith.constant 5.000000e-01 : f32
    %33 = vector.broadcast %cst_13 : f32 to vector<4x16x15xf32>
    %34 = arith.mulf %33, %29 : vector<4x16x15xf32>
    %35 = arith.mulf %34, %29 : vector<4x16x15xf32>
    %cst_14 = arith.constant 5.000000e-01 : f32
    %36 = vector.broadcast %cst_14 : f32 to vector<4x16x15xf32>
    %37 = arith.subf %30, %36 : vector<4x16x15xf32>
    %38 = arith.select %32, %35, %37 : vector<4x16x15xi1>, vector<4x16x15xf32>
    %cst_15 = arith.constant dense<0.000000e+00> : vector<16x15xf32>
    %39 = vector.multi_reduction <add>, %38, %cst_15 [0] : vector<4x16x15xf32> to vector<16x15xf32>
    %40 = vector.extract_strided_slice %3 {offsets = [0, 1], sizes = [16, 15], strides = [1, 1]} : vector<16x16xf32> to vector<16x15xf32>
    %41 = vector.extract_strided_slice %3 {offsets = [0, 0], sizes = [16, 15], strides = [1, 1]} : vector<16x16xf32> to vector<16x15xf32>
    %42 = arith.mulf %40, %41 : vector<16x15xf32>
    %43 = vector.extract_strided_slice %6 {offsets = [0, 1], sizes = [16, 15], strides = [1, 1]} : vector<16x16xf32> to vector<16x15xf32>
    %44 = vector.extract_strided_slice %6 {offsets = [0, 0], sizes = [16, 15], strides = [1, 1]} : vector<16x16xf32> to vector<16x15xf32>
    %45 = arith.mulf %43, %44 : vector<16x15xf32>
    %46 = arith.mulf %39, %42 : vector<16x15xf32>
    %cst_16 = arith.constant 0.000000e+00 : f32
    %47 = vector.broadcast %cst_16 : f32 to vector<1x1xf32>
    %cst_17 = arith.constant dense<0.000000e+00> : vector<16xf32>
    %48 = vector.multi_reduction <add>, %22, %cst_17 [0] : vector<15x16xf32> to vector<16xf32>
    %49 = vector.shape_cast %48 : vector<16xf32> to vector<1x16xf32>
    %50 = arith.mulf %25, %26 : vector<15x16xf32>
    %cst_18 = arith.constant dense<0.000000e+00> : vector<16xf32>
    %51 = vector.multi_reduction <add>, %50, %cst_18 [0] : vector<15x16xf32> to vector<16xf32>
    %52 = vector.shape_cast %51 : vector<16xf32> to vector<1x16xf32>
    %cst_19 = arith.constant dense<0.000000e+00> : vector<16xf32>
    %53 = vector.multi_reduction <add>, %26, %cst_19 [0] : vector<15x16xf32> to vector<16xf32>
    %54 = vector.shape_cast %53 : vector<16xf32> to vector<1x16xf32>
    %cst_20 = arith.constant dense<0.000000e+00> : vector<15xf32>
    %55 = vector.multi_reduction <add>, %42, %cst_20 [0] : vector<16x15xf32> to vector<15xf32>
    %56 = vector.shape_cast %55 : vector<15xf32> to vector<1x15xf32>
    %57 = tpu.concatenate %56, %47 in 1 : vector<1x15xf32>, vector<1x1xf32> -> vector<1x16xf32>
    %58 = arith.mulf %45, %46 : vector<16x15xf32>
    %cst_21 = arith.constant dense<0.000000e+00> : vector<15xf32>
    %59 = vector.multi_reduction <add>, %58, %cst_21 [0] : vector<16x15xf32> to vector<15xf32>
    %60 = vector.shape_cast %59 : vector<15xf32> to vector<1x15xf32>
    %61 = tpu.concatenate %60, %47 in 1 : vector<1x15xf32>, vector<1x1xf32> -> vector<1x16xf32>
    %cst_22 = arith.constant dense<0.000000e+00> : vector<15xf32>
    %62 = vector.multi_reduction <add>, %46, %cst_22 [0] : vector<16x15xf32> to vector<15xf32>
    %63 = vector.shape_cast %62 : vector<15xf32> to vector<1x15xf32>
    %64 = tpu.concatenate %63, %47 in 1 : vector<1x15xf32>, vector<1x1xf32> -> vector<1x16xf32>
    %65 = tpu.concatenate %49, %52, %54, %57, %61, %64 in 0 : vector<1x16xf32>, vector<1x16xf32>, vector<1x16xf32>, vector<1x16xf32>, vector<1x16xf32>, vector<1x16xf32> -> vector<6x16xf32>
    %c0_23 = arith.constant 0 : index
    %c0_24 = arith.constant 0 : index
    %c0_25 = arith.constant 0 : index
    %66 = vector.load %arg4[%c0_23, %c0_24, %c0_25] : memref<1x6x16xf32, #tpu.memory_space<vmem>>, vector<1x6x16xf32>
    %67 = vector.shape_cast %66 : vector<1x6x16xf32> to vector<6x16xf32>
    %68 = vector.shape_cast %65 : vector<6x16xf32> to vector<1x6x16xf32>
    tpu.vector_store %arg4[%c0_23, %c0_24, %c0_25], %68 {strides = array<i32>} : memref<1x6x16xf32, #tpu.memory_space<vmem>>, vector<1x6x16xf32>,
    return
  }
  func.func @transform_0(%arg0: i32) -> (i32, i32, i32, i32) {
    %c0_i32 = arith.constant 0 : i32
    %c0_i32_0 = arith.constant 0 : i32
    %c0_i32_1 = arith.constant 0 : i32
    %c0_i32_2 = arith.constant 0 : i32
    return %arg0, %c0_i32, %c0_i32_0, %c0_i32_1 : i32, i32, i32, i32
  }
  func.func @transform_1(%arg0: i32) -> (i32, i32, i32) {
    %c0_i32 = arith.constant 0 : i32
    %c0_i32_0 = arith.constant 0 : i32
    %c0_i32_1 = arith.constant 0 : i32
    return %arg0, %c0_i32, %c0_i32_0 : i32, i32, i32
  }
  func.func @transform_2(%arg0: i32) -> (i32, i32, i32) {
    %c0_i32 = arith.constant 0 : i32
    %c0_i32_0 = arith.constant 0 : i32
    %c0_i32_1 = arith.constant 0 : i32
    return %arg0, %c0_i32, %c0_i32_0 : i32, i32, i32
  }
  func.func @transform_3(%arg0: i32) -> (i32, i32, i32) {
    %c0_i32 = arith.constant 0 : i32
    %c0_i32_0 = arith.constant 0 : i32
    %c0_i32_1 = arith.constant 0 : i32
    return %arg0, %c0_i32, %c0_i32_0 : i32, i32, i32
  }
}

</mosaic_0001>

<llo_original>
// kernel: tv_loss.1
$region0: #{tv_loss.1}
  #allocation0 [shape = 'u32[]', space=smem, size = 0x4, offset = 0x4, fixed_abs, tag = 'smem constant byte address 0x4 - core index']
  #allocation1 [shape = 'u32[72,128]{1,0:T(1,128)}', space=vmem, size = 0x9000, scoped, tag = 'internal scratch']
  %s0 = inlined_call_operand.hbm [shape: f32[2,4,16,16], index: 0, kind: input, shape index: {}]
  %s1 = inlined_call_operand.hbm [shape: f32[2,16,16], index: 1, kind: input, shape index: {}]
  %s2 = inlined_call_operand.hbm [shape: f32[2,16,16], index: 2, kind: input, shape index: {}]
  %s3 = inlined_call_operand.vmem [shape: f32[2,6,16], index: 3, kind: output, shape index: {}]
  %s4 = sld [smem:[#allocation0]]
  $region57: #{tv_loss.1} parent=0
    _
  %s6 = ssub.s32 1, %s4
  %s7 = scalar_select 0, %s6, %s4
  $region1: #{tv_loss.1} parent=0
    #allocation2 [shape = 'u8[65536]{0}', space=vmem, size = 0x10000, scoped, tag = 'input window, operand 0']
    #allocation3 [shape = 's32[2]{0}', space=sflag, size = 0x8, scoped, tag = 'scoped memory for tv_loss.1']
    #allocation4 [shape = 'u8[16384]{0}', space=vmem, size = 0x4000, scoped, tag = 'input window, operand 1']
    #allocation5 [shape = 's32[2]{0}', space=sflag, size = 0x8, scoped, tag = 'scoped memory for tv_loss.1']
    #allocation6 [shape = 'u8[16384]{0}', space=vmem, size = 0x4000, scoped, tag = 'input window, operand 2']
    %8 = vsyncpa [#allocation3], 0
    %s9 = scalar_lea.sflag [#allocation3], 1
    %10 = vsyncpa %s9, 0
    %11 = vsyncpa [#allocation5], 0
    %s12 = scalar_lea.sflag [#allocation5], 1
    %13 = vsyncpa %s12, 0
    loop: start=0, step=1, limit=4
    $region2: #{tv_loss.1} parent=1 // loop_pre_header
      _
    $region3: #{tv_loss.1} parent=1 // loop_header
      %s15 = sphi 0, %s19
      %p16 = scmp.ge.s32.totalorder %s15, 4
      %s25 = sphi 0, %s27
      %s28 = sphi 0, %s25
      %s29 = sphi 0, %s28
      %s45 = sphi 0, %s29
      %s51 = sphi 0, %s53
      %s54 = sphi 0, %s51
      %s55 = sphi 0, %s54
      %s71 = sphi 0, %s55
      %s77 = sphi 0, %s79
      %s80 = sphi 0, %s77
      %s81 = sphi 0, %s80
      %s97 = sphi 0, %s81
      %s103 = sphi 0, %s105
      %s106 = sphi 0, %s103
      %s107 = sphi 0, %s106
      %s123 = sphi 0, %s107
    $region4: #{tv_loss.1} parent=1 // loop_header_branch
      %18 = sbr.rel (%p16) target = $region8
    $region5: #{tv_loss.1} parent=1 // loop_body
      %s20 = ssub.s32 %s15, 1
      %s21 = ssub.s32 %s15, 2
      %s22 = sadd.s32 %s15, 1
      %s23 = ssub.s32 %s15, %s22
      %p24 = scmp.eq.s32.totalorder %s23, 0
      %s26 = sadd.s32 %s25, 1
      %s27 = scalar_select %p24, %s25, %s26
      %p30 = pneg %p24
      %p31 = scmp.eq.s32.totalorder %s15, 1
      %p32 = por %p30, %p31
      %p33 = scmp.ne.s32.totalorder %s25, %s28
      %p34 = scmp.eq.s32.totalorder %s15, 0
      %p35 = por %p33, %p34
      %p36 = scmp.ne.s32.totalorder %s25, %s28
      %p37 = scmp.eq.s32.totalorder %s20, 1
      %p38 = por %p36, %p37
      %p39 = scmp.ne.s32.totalorder %s28, %s29
      %p40 = scmp.eq.s32.totalorder %s20, 0
      %p41 = por %p39, %p40
      %p42 = scmp.ne.s32.totalorder %s28, %s29
      %p43 = scmp.eq.s32.totalorder %s21, 1
      %p44 = por %p42, %p43
      %p46 = scmp.ne.s32.totalorder %s29, %s45
      %p47 = scmp.eq.s32.totalorder %s21, 0
      %p48 = por %p46, %p47
      %s49 = ssub.s32 %s15, %s22
      %p50 = scmp.eq.s32.totalorder %s49, 0
      %s52 = sadd.s32 %s51, 1
      %s53 = scalar_select %p50, %s51, %s52
      %p56 = pneg %p50
      %p57 = scmp.eq.s32.totalorder %s15, 1
      %p58 = por %p56, %p57
      %p59 = scmp.ne.s32.totalorder %s51, %s54
      %p60 = scmp.eq.s32.totalorder %s15, 0
      %p61 = por %p59, %p60
      %p62 = scmp.ne.s32.totalorder %s51, %s54
      %p63 = scmp.eq.s32.totalorder %s20, 1
      %p64 = por %p62, %p63
      %p65 = scmp.ne.s32.totalorder %s54, %s55
      %p66 = scmp.eq.s32.totalorder %s20, 0
      %p67 = por %p65, %p66
      %p68 = scmp.ne.s32.totalorder %s54, %s55
      %p69 = scmp.eq.s32.totalorder %s21, 1
      %p70 = por %p68, %p69
      %p72 = scmp.ne.s32.totalorder %s55, %s71
      %p73 = scmp.eq.s32.totalorder %s21, 0
      %p74 = por %p72, %p73
      %s75 = ssub.s32 %s15, %s22
      %p76 = scmp.eq.s32.totalorder %s75, 0
      %s78 = sadd.s32 %s77, 1
      %s79 = scalar_select %p76, %s77, %s78
      %p82 = pneg %p76
      %p83 = scmp.eq.s32.totalorder %s15, 1
      %p84 = por %p82, %p83
      %p85 = scmp.ne.s32.totalorder %s77, %s80
      %p86 = scmp.eq.s32.totalorder %s15, 0
      %p87 = por %p85, %p86
      %p88 = scmp.ne.s32.totalorder %s77, %s80
      %p89 = scmp.eq.s32.totalorder %s20, 1
      %p90 = por %p88, %p89
      %p91 = scmp.ne.s32.totalorder %s80, %s81
      %p92 = scmp.eq.s32.totalorder %s20, 0
      %p93 = por %p91, %p92
      %p94 = scmp.ne.s32.totalorder %s80, %s81
      %p95 = scmp.eq.s32.totalorder %s21, 1
      %p96 = por %p94, %p95
      %p98 = scmp.ne.s32.totalorder %s81, %s97
      %p99 = scmp.eq.s32.totalorder %s21, 0
      %p100 = por %p98, %p99
      %s101 = ssub.s32 %s15, %s22
      %p102 = scmp.eq.s32.totalorder %s101, 0
      %s104 = sadd.s32 %s103, 1
      %s105 = scalar_select %p102, %s103, %s104
      %p108 = pneg %p102
      %p109 = scmp.eq.s32.totalorder %s15, 1
      %p110 = por %p108, %p109
      %p111 = scmp.ne.s32.totalorder %s103, %s106
      %p112 = scmp.eq.s32.totalorder %s15, 0
      %p113 = por %p111, %p112
      %p114 = scmp.ne.s32.totalorder %s103, %s106
      %p115 = scmp.eq.s32.totalorder %s20, 1
      %p116 = por %p114, %p115
      %p117 = scmp.ne.s32.totalorder %s106, %s107
      %p118 = scmp.eq.s32.totalorder %s20, 0
      %p119 = por %p117, %p118
      %p120 = scmp.ne.s32.totalorder %s106, %s107
      %p121 = scmp.eq.s32.totalorder %s21, 1
      %p122 = por %p120, %p121
      %p124 = scmp.ne.s32.totalorder %s107, %s123
      %p125 = scmp.eq.s32.totalorder %s21, 0
      %p126 = por %p124, %p125
      %p127 = scmp.le.s32.totalorder 1, %s15
      %p128 = scmp.lt.s32.totalorder %s15, 3
      %p129 = pnand %p127, %p128
      %p130 = pneg %p129
      // Predicated region
      $region9: #{tv_loss.1} parent=5 // pred_check
        _
      $region10: #{tv_loss.1} parent=5 // pred_check_branch
        %132 = sbr.rel (%p129) target = $region12
      $region11: #{tv_loss.1} parent=5 // pred_region
        %s133 = ssub.s32 %s15, 1
      $region12: #{tv_loss.1} parent=5 // pred_fallthru
        _
      %p134 = scmp.lt.s32.totalorder %s15, 2
      // Predicated region
      $region13: #{tv_loss.1} parent=5 // pred_check
        %p135 = pneg %p134
      $region14: #{tv_loss.1} parent=5 // pred_check_branch
        %137 = sbr.rel (%p135) target = $region16
      $region15: #{tv_loss.1} parent=5 // pred_region
        // Predicated region
        $region17: #{tv_loss.1} parent=15 // pred_check
          %p138 = pneg %p35
        $region18: #{tv_loss.1} parent=15 // pred_check_branch
          %140 = sbr.rel (%p138) target = $region20
        $region19: #{tv_loss.1} parent=15 // pred_region
          %s141 = sand.u32 %s25, 1
          %s142 = scalar_lea.sflag [#allocation3], %s141
          %s143 = sand.u32 %s25, 1
          %s144 = smul.addr %s143, 64
          %s145 = scalar_lea.vmem [#allocation2], %s144
          %147 = vsyncadd %s142, 0
          %s148 = smul.addr %s15, 8
          %s149 = smul.addr %s148, 8
          %s150 = scalar_lea.hbm %s0, %s149
          %s151 = sshll.u32 %s150, 4
          %s152 = int_to_ptr.hbm [resolvable:$true] %s151
          %s153 = sshll.u32 %s145, 4
          %s154 = int_to_ptr.vmem [resolvable:$true] %s153
          %159 = dma.hbm_to_vmem [thread:$0]  %s152, 1024, %s154, %s142, 128, 128, 8
        $region20: #{tv_loss.1} parent=15 // pred_fallthru
          _
        // Predicated region
        $region21: #{tv_loss.1} parent=15 // pred_check
          %p160 = pneg %p61
        $region22: #{tv_loss.1} parent=15 // pred_check_branch
          %162 = sbr.rel (%p160) target = $region24
        $region23: #{tv_loss.1} parent=15 // pred_region
          %s163 = sand.u32 %s15, 1
          %s164 = scalar_lea.sflag [#allocation5], %s163
          %s165 = sand.u32 %s51, 1
          %s166 = smul.addr %s165, 16
          %s167 = scalar_lea.vmem [#allocation4], %s166
          %169 = vsyncadd %s164, 0
          %s170 = smul.addr %s15, 2
          %s171 = smul.addr %s170, 8
          %s172 = scalar_lea.hbm %s1, %s171
          %s173 = sshll.u32 %s172, 4
          %s174 = int_to_ptr.hbm [resolvable:$true] %s173
          %s175 = sshll.u32 %s167, 4
          %s176 = int_to_ptr.vmem [resolvable:$true] %s175
          %181 = dma.hbm_to_vmem [thread:$0]  %s174, 256, %s176, %s164, 128, 128, 8
        $region24: #{tv_loss.1} parent=15 // pred_fallthru
          _
        // Predicated region
        $region25: #{tv_loss.1} parent=15 // pred_check
          %p182 = pneg %p87
        $region26: #{tv_loss.1} parent=15 // pred_check_branch
          %184 = sbr.rel (%p182) target = $region28
        $region27: #{tv_loss.1} parent=15 // pred_region
          %s185 = sand.u32 %s15, 1
          %s186 = scalar_lea.sflag [#allocation5], %s185
          %s187 = sand.u32 %s77, 1
          %s188 = smul.addr %s187, 16
          %s189 = scalar_lea.vmem [#allocation6], %s188
          %191 = vsyncadd %s186, 0
          %s192 = smul.addr %s15, 2
          %s193 = smul.addr %s192, 8
          %s194 = scalar_lea.hbm %s2, %s193
          %s195 = sshll.u32 %s194, 4
          %s196 = int_to_ptr.hbm [resolvable:$true] %s195
          %s197 = sshll.u32 %s189, 4
          %s198 = int_to_ptr.vmem [resolvable:$true] %s197
          %203 = dma.hbm_to_vmem [thread:$0]  %s196, 256, %s198, %s186, 128, 128, 8
        $region28: #{tv_loss.1} parent=15 // pred_fallthru
          _
      $region16: #{tv_loss.1} parent=5 // pred_fallthru
        _
      %p204 = scmp.le.s32.totalorder 1, %s15
      %p205 = scmp.lt.s32.totalorder %s15, 3
      %p206 = pnand %p204, %p205
      %p207 = pneg %p206
      // Predicated region
      $region29: #{tv_loss.1} parent=5 // pred_check
        _
      $region30: #{tv_loss.1} parent=5 // pred_check_branch
        %209 = sbr.rel (%p206) target = $region32
      $region31: #{tv_loss.1} parent=5 // pred_region
        %s210 = ssub.s32 %s15, 1
        %s211 = sand.u32 %s28, 1
        %s212 = scalar_lea.sflag [#allocation3], %s211
        %s213 = sand.u32 %s28, 1
        %s214 = smul.addr %s213, 64
        %s215 = scalar_lea.vmem [#allocation2], %s214
        // Predicated region
        $region33: #{tv_loss.1} parent=31 // pred_check
          %p216 = pneg %p41
        $region34: #{tv_loss.1} parent=31 // pred_check_branch
          %218 = sbr.rel (%p216) target = $region36
        $region35: #{tv_loss.1} parent=31 // pred_region
          %220 = dma.done %s212, 1024
        $region36: #{tv_loss.1} parent=31 // pred_fallthru
          _
        %s221 = sand.u32 %s20, 1
        %s222 = scalar_lea.sflag [#allocation5], %s221
        %s223 = sand.u32 %s54, 1
        %s224 = smul.addr %s223, 16
        %s225 = scalar_lea.vmem [#allocation4], %s224
        // Predicated region
        $region37: #{tv_loss.1} parent=31 // pred_check
          %p226 = pneg %p67
        $region38: #{tv_loss.1} parent=31 // pred_check_branch
          %228 = sbr.rel (%p226) target = $region40
        $region39: #{tv_loss.1} parent=31 // pred_region
          %230 = dma.done %s222, 256
        $region40: #{tv_loss.1} parent=31 // pred_fallthru
          _
        %s231 = sand.u32 %s20, 1
        %s232 = scalar_lea.sflag [#allocation5], %s231
        %s233 = sand.u32 %s80, 1
        %s234 = smul.addr %s233, 16
        %s235 = scalar_lea.vmem [#allocation6], %s234
        // Predicated region
        $region41: #{tv_loss.1} parent=31 // pred_check
          %p236 = pneg %p93
        $region42: #{tv_loss.1} parent=31 // pred_check_branch
          %238 = sbr.rel (%p236) target = $region44
        $region43: #{tv_loss.1} parent=31 // pred_region
          %240 = dma.done %s232, 256
        $region44: #{tv_loss.1} parent=31 // pred_fallthru
          _
        %s241 = sand.u32 %s28, 1
        %s242 = scalar_lea.sflag [#allocation3], %s241
        %s243 = sand.u32 %s28, 1
        %s244 = smul.addr %s243, 64
        %s245 = scalar_lea.vmem [#allocation2], %s244
        %p246 = pneg %p41
        %p247 = pneg %p38
        %s248 = sand.u32 %s20, 1
        %s249 = scalar_lea.sflag [#allocation5], %s248
        %s250 = sand.u32 %s54, 1
        %s251 = smul.addr %s250, 16
        %s252 = scalar_lea.vmem [#allocation4], %s251
        %p253 = pneg %p67
        %p254 = pneg %p64
        %s255 = sand.u32 %s20, 1
        %s256 = scalar_lea.sflag [#allocation5], %s255
        %s257 = sand.u32 %s80, 1
        %s258 = smul.addr %s257, 16
        %s259 = scalar_lea.vmem [#allocation6], %s258
        %p260 = pneg %p93
        %p261 = pneg %p90
        %p262 = pneg %p119
        %p263 = pneg %p116
        %p264 = scmp.lt.s32.totalorder %s20, 1
        %s265 = scalar_select %p264, %s20, 1
        %s266 = smul.addr %s265, 8
        %s267 = scalar_lea.vmem %s3, %s266
        %p268 = scmp.lt.s32.totalorder %s20, 1
        %s269 = scalar_select %p268, %s20, 1
        %s270 = smul.addr %s269, 8
        %s271 = scalar_lea.vmem %s3, %s270
        %v272 = vld [vmem:[%s215] sm:$0xff]
        %v273 = vld [vmem:[%s215 + $0x8] sm:$0xff]
        %v274 = vld [vmem:[%s215 + $0x10] sm:$0xff]
        %v275 = vld [vmem:[%s215 + $0x18] sm:$0xff]
        %v276 = vld [vmem:[%s215 + $0x20] sm:$0xff]
        %v277 = vld [vmem:[%s215 + $0x28] sm:$0xff]
        %v278 = vld [vmem:[%s215 + $0x30] sm:$0xff]
        %v279 = vld [vmem:[%s215 + $0x38] sm:$0xff]
        %v280 = vld [vmem:[%s225] sm:$0xff]
        %v281 = vld [vmem:[%s225 + $0x8] sm:$0xff]
        %v282 = vld [vmem:[%s235] sm:$0xff]
        %v283 = vld [vmem:[%s235 + $0x8] sm:$0xff]
        %v284 = vrsqrt.pop %v282
        %v285 = vmul.f32 %v284, %v282
        %v286 = vmul.f32 %v285, %v284
        %v287 = vmul.f32 0.5, %v286
        %v288 = vsub.f32 1.5, %v287
        %v289 = vmul.f32 %v284, %v288
        %v290 = vmul.f32 %v282, %v289
        %vm291 = vcmp.eq.f32.partialorder %v282, inf
        %v292 = vsel %vm291, %v282, %v290
        %vm293 = vcmp.eq.f32.partialorder %v282, 0.0
        %v294 = vand.u32 %v282, 2147483648
        %v295 = vsel %vm293, %v294, %v292
        %v296 = vrsqrt.pop %v283
        %v297 = vmul.f32 %v296, %v283
        %v298 = vmul.f32 %v297, %v296
        %v299 = vmul.f32 0.5, %v298
        %v300 = vsub.f32 1.5, %v299
        %v301 = vmul.f32 %v296, %v300
        %v302 = vmul.f32 %v283, %v301
        %vm303 = vcmp.eq.f32.partialorder %v283, inf
        %v304 = vsel %vm303, %v283, %v302
        %vm305 = vcmp.eq.f32.partialorder %v283, 0.0
        %v306 = vand.u32 %v283, 2147483648
        %v307 = vsel %vm305, %v306, %v304
        %vm316 = vcmask 1040384
        %v317 = vrot.slane %v272, 7
        %v318 = vrot.slane %v273, 7
        %v319 = vsel %vm316, %v317, %v318
        %v320 = vrot.slane %v274, 7
        %v321 = vrot.slane %v275, 7
        %v322 = vsel %vm316, %v320, %v321
        %v323 = vrot.slane %v276, 7
        %v324 = vrot.slane %v277, 7
        %v325 = vsel %vm316, %v323, %v324
        %v326 = vrot.slane %v278, 7
        %v327 = vrot.slane %v279, 7
        %v328 = vsel %vm316, %v326, %v327
        %v337 = vsub.f32 %v272, %v317
        %v338 = vsub.f32 %v273, %v319
        %v339 = vsub.f32 %v274, %v320
        %v340 = vsub.f32 %v275, %v322
        %v341 = vsub.f32 %v276, %v323
        %v342 = vsub.f32 %v277, %v325
        %v343 = vsub.f32 %v278, %v326
        %v344 = vsub.f32 %v279, %v328
        %v345 = vand.u32 2147483647, %v337
        %v346 = vand.u32 2147483647, %v338
        %v347 = vand.u32 2147483647, %v339
        %v348 = vand.u32 2147483647, %v340
        %v349 = vand.u32 2147483647, %v341
        %v350 = vand.u32 2147483647, %v342
        %v351 = vand.u32 2147483647, %v343
        %v352 = vand.u32 2147483647, %v344
        %vm353 = vcmp.lt.f32.partialorder %v345, 1.0
        %vm354 = vcmp.lt.f32.partialorder %v346, 1.0
        %vm355 = vcmp.lt.f32.partialorder %v347, 1.0
        %vm356 = vcmp.lt.f32.partialorder %v348, 1.0
        %vm357 = vcmp.lt.f32.partialorder %v349, 1.0
        %vm358 = vcmp.lt.f32.partialorder %v350, 1.0
        %vm359 = vcmp.lt.f32.partialorder %v351, 1.0
        %vm360 = vcmp.lt.f32.partialorder %v352, 1.0
        %v361 = vmul.f32 %v337, 0.5
        %v362 = vmul.f32 %v338, 0.5
        %v363 = vmul.f32 %v339, 0.5
        %v364 = vmul.f32 %v340, 0.5
        %v365 = vmul.f32 %v341, 0.5
        %v366 = vmul.f32 %v342, 0.5
        %v367 = vmul.f32 %v343, 0.5
        %v368 = vmul.f32 %v344, 0.5
        %v369 = vmul.f32 %v361, %v337
        %v370 = vmul.f32 %v362, %v338
        %v371 = vmul.f32 %v363, %v339
        %v372 = vmul.f32 %v364, %v340
        %v373 = vmul.f32 %v365, %v341
        %v374 = vmul.f32 %v366, %v342
        %v375 = vmul.f32 %v367, %v343
        %v376 = vmul.f32 %v368, %v344
        %v377 = vsub.f32 %v345, 0.5
        %v378 = vsub.f32 %v346, 0.5
        %v379 = vsub.f32 %v347, 0.5
        %v380 = vsub.f32 %v348, 0.5
        %v381 = vsub.f32 %v349, 0.5
        %v382 = vsub.f32 %v350, 0.5
        %v383 = vsub.f32 %v351, 0.5
        %v384 = vsub.f32 %v352, 0.5
        %v385 = vsel %vm353, %v369, %v377
        %v386 = vsel %vm354, %v370, %v378
        %v387 = vsel %vm355, %v371, %v379
        %v388 = vsel %vm356, %v372, %v380
        %v389 = vsel %vm357, %v373, %v381
        %v390 = vsel %vm358, %v374, %v382
        %v391 = vsel %vm359, %v375, %v383
        %v392 = vsel %vm360, %v376, %v384
        %vm393 = vcmask 130049
        %v394 = vsel %vm393, %v385, 0.0
        %v395 = vsel %vm393, %v387, 0.0
        %v396 = vadd.f32 %v394, %v395
        %v397 = vsel %vm393, %v389, 0.0
        %v398 = vadd.f32 %v396, %v397
        %v399 = vsel %vm393, %v391, 0.0
        %v400 = vadd.f32 %v398, %v399
        %vm401 = vcmask 130048
        %v402 = vsel %vm401, %v386, 0.0
        %v403 = vsel %vm401, %v388, 0.0
        %v404 = vadd.f32 %v402, %v403
        %v405 = vsel %vm401, %v390, 0.0
        %v406 = vadd.f32 %v404, %v405
        %v407 = vsel %vm401, %v392, 0.0
        %v408 = vadd.f32 %v406, %v407
        %v411 = vrot.slane %v280, 7
        %v412 = vrot.slane %v281, 7
        %v413 = vsel %vm316, %v411, %v412
        %v416 = vmul.f32 %v280, %v411
        %v417 = vmul.f32 %v281, %v413
        %v420 = vrot.slane %v295, 7
        %v421 = vrot.slane %v307, 7
        %v422 = vsel %vm316, %v420, %v421
        %v425 = vmul.f32 %v295, %v420
        %v426 = vmul.f32 %v307, %v422
        %v427 = vmul.f32 %v400, %v416
        %v428 = vmul.f32 %v408, %v417
        %429 = vrot.lane.b32.xlu0 %v272, 1
        %v430 = vpop.permute.xlu0 %429
        %431 = vrot.lane.b32.xlu0 %v273, 1
        %v432 = vpop.permute.xlu0 %431
        %433 = vrot.lane.b32.xlu0 %v274, 1
        %v434 = vpop.permute.xlu0 %433
        %435 = vrot.lane.b32.xlu0 %v275, 1
        %v436 = vpop.permute.xlu0 %435
        %437 = vrot.lane.b32.xlu0 %v276, 1
        %v438 = vpop.permute.xlu0 %437
        %439 = vrot.lane.b32.xlu0 %v277, 1
        %v440 = vpop.permute.xlu0 %439
        %441 = vrot.lane.b32.xlu0 %v278, 1
        %v442 = vpop.permute.xlu0 %441
        %443 = vrot.lane.b32.xlu0 %v279, 1
        %v444 = vpop.permute.xlu0 %443
        %v453 = vsub.f32 %v272, %v430
        %v454 = vsub.f32 %v273, %v432
        %v455 = vsub.f32 %v274, %v434
        %v456 = vsub.f32 %v275, %v436
        %v457 = vsub.f32 %v276, %v438
        %v458 = vsub.f32 %v277, %v440
        %v459 = vsub.f32 %v278, %v442
        %v460 = vsub.f32 %v279, %v444
        %v461 = vand.u32 2147483647, %v453
        %v462 = vand.u32 2147483647, %v454
        %v463 = vand.u32 2147483647, %v455
        %v464 = vand.u32 2147483647, %v456
        %v465 = vand.u32 2147483647, %v457
        %v466 = vand.u32 2147483647, %v458
        %v467 = vand.u32 2147483647, %v459
        %v468 = vand.u32 2147483647, %v460
        %vm469 = vcmp.lt.f32.partialorder %v461, 1.0
        %vm470 = vcmp.lt.f32.partialorder %v462, 1.0
        %vm471 = vcmp.lt.f32.partialorder %v463, 1.0
        %vm472 = vcmp.lt.f32.partialorder %v464, 1.0
        %vm473 = vcmp.lt.f32.partialorder %v465, 1.0
        %vm474 = vcmp.lt.f32.partialorder %v466, 1.0
        %vm475 = vcmp.lt.f32.partialorder %v467, 1.0
        %vm476 = vcmp.lt.f32.partialorder %v468, 1.0
        %v477 = vmul.f32 %v453, 0.5
        %v478 = vmul.f32 %v454, 0.5
        %v479 = vmul.f32 %v455, 0.5
        %v480 = vmul.f32 %v456, 0.5
        %v481 = vmul.f32 %v457, 0.5
        %v482 = vmul.f32 %v458, 0.5
        %v483 = vmul.f32 %v459, 0.5
        %v484 = vmul.f32 %v460, 0.5
        %v485 = vmul.f32 %v477, %v453
        %v486 = vmul.f32 %v478, %v454
        %v487 = vmul.f32 %v479, %v455
        %v488 = vmul.f32 %v480, %v456
        %v489 = vmul.f32 %v481, %v457
        %v490 = vmul.f32 %v482, %v458
        %v491 = vmul.f32 %v483, %v459
        %v492 = vmul.f32 %v484, %v460
        %v493 = vsub.f32 %v461, 0.5
        %v494 = vsub.f32 %v462, 0.5
        %v495 = vsub.f32 %v463, 0.5
        %v496 = vsub.f32 %v464, 0.5
        %v497 = vsub.f32 %v465, 0.5
        %v498 = vsub.f32 %v466, 0.5
        %v499 = vsub.f32 %v467, 0.5
        %v500 = vsub.f32 %v468, 0.5
        %v501 = vsel %vm469, %v485, %v493
        %v502 = vsel %vm470, %v486, %v494
        %v503 = vsel %vm471, %v487, %v495
        %v504 = vsel %vm472, %v488, %v496
        %v505 = vsel %vm473, %v489, %v497
        %v506 = vsel %vm474, %v490, %v498
        %v507 = vsel %vm475, %v491, %v499
        %v508 = vsel %vm476, %v492, %v500
        %vm509 = vcmask 130056
        %v510 = vsel %vm509, %v501, 0.0
        %v511 = vsel %vm509, %v503, 0.0
        %v512 = vadd.f32 %v510, %v511
        %v513 = vsel %vm509, %v505, 0.0
        %v514 = vadd.f32 %v512, %v513
        %v515 = vsel %vm509, %v507, 0.0
        %v516 = vadd.f32 %v514, %v515
        %v517 = vsel %vm509, %v502, 0.0
        %v518 = vsel %vm509, %v504, 0.0
        %v519 = vadd.f32 %v517, %v518
        %v520 = vsel %vm509, %v506, 0.0
        %v521 = vadd.f32 %v519, %v520
        %v522 = vsel %vm509, %v508, 0.0
        %v523 = vadd.f32 %v521, %v522
        %524 = vrot.lane.b32.xlu0 %v280, 1
        %v525 = vpop.permute.xlu0 %524
        %526 = vrot.lane.b32.xlu0 %v281, 1
        %v527 = vpop.permute.xlu0 %526
        %v530 = vmul.f32 %v280, %v525
        %v531 = vmul.f32 %v281, %v527
        %532 = vrot.lane.b32.xlu0 %v295, 1
        %v533 = vpop.permute.xlu0 %532
        %534 = vrot.lane.b32.xlu0 %v307, 1
        %v535 = vpop.permute.xlu0 %534
        %v538 = vmul.f32 %v295, %v533
        %v539 = vmul.f32 %v307, %v535
        %v540 = vmul.f32 %v516, %v530
        %v541 = vmul.f32 %v523, %v531
        %vm544 = vcmask 1046528
        %v545 = vrot.slane %v416, 1
        %v546 = vrot.slane %v417, 1
        %v547 = vsel %vm544, %v545, %v546
        %v550 = vsel %vm401, %v547, 0.0
        %vm551 = vcmask 129024
        %v552 = vsel %vm551, %v546, 0.0
        %v553 = vadd.f32 %v550, %v552
        %v554 = vrot.slane %v553, 4
        %v555 = vadd.f32 %v553, %v554
        %v556 = vrot.slane %v555, 2
        %v557 = vadd.f32 %v555, %v556
        %v558 = vrot.slane %v557, 1
        %v559 = vadd.f32 %v557, %v558
        %v560 = vmul.f32 %v425, %v427
        %v561 = vmul.f32 %v426, %v428
        %v564 = vrot.slane %v560, 1
        %v565 = vrot.slane %v561, 1
        %v566 = vsel %vm544, %v564, %v565
        %v569 = vsel %vm401, %v566, 0.0
        %v570 = vsel %vm551, %v565, 0.0
        %v571 = vadd.f32 %v569, %v570
        %v572 = vrot.slane %v571, 4
        %v573 = vadd.f32 %v571, %v572
        %v574 = vrot.slane %v573, 2
        %v575 = vadd.f32 %v573, %v574
        %v576 = vrot.slane %v575, 1
        %v577 = vadd.f32 %v575, %v576
        %v580 = vrot.slane %v427, 1
        %v581 = vrot.slane %v428, 1
        %v582 = vsel %vm544, %v580, %v581
        %v585 = vsel %vm401, %v582, 0.0
        %v586 = vsel %vm551, %v581, 0.0
        %v587 = vadd.f32 %v585, %v586
        %v588 = vrot.slane %v587, 4
        %v589 = vadd.f32 %v587, %v588
        %v590 = vrot.slane %v589, 2
        %v591 = vadd.f32 %v589, %v590
        %v592 = vrot.slane %v591, 1
        %v593 = vadd.f32 %v591, %v592
        %v594 = vsel %vm509, %v530, 0.0
        %v595 = vsel %vm509, %v531, 0.0
        %v596 = vadd.f32 %v594, %v595
        %v597 = vrot.slane %v596, 4
        %v598 = vadd.f32 %v596, %v597
        %v599 = vrot.slane %v598, 2
        %v600 = vadd.f32 %v598, %v599
        %v601 = vrot.slane %v600, 1
        %v602 = vadd.f32 %v600, %v601
        %604 = vrot.lane.b32.xlu0 %v602, 127
        %v605 = vpop.permute.xlu0 %604
        %vm607 = vcmask 121856
        %v608 = vsel %vm607, %v605, 0.0
        %v609 = vmul.f32 %v538, %v540
        %v610 = vmul.f32 %v539, %v541
        %v611 = vsel %vm509, %v609, 0.0
        %v612 = vsel %vm509, %v610, 0.0
        %v613 = vadd.f32 %v611, %v612
        %v614 = vrot.slane %v613, 4
        %v615 = vadd.f32 %v613, %v614
        %v616 = vrot.slane %v615, 2
        %v617 = vadd.f32 %v615, %v616
        %v618 = vrot.slane %v617, 1
        %v619 = vadd.f32 %v617, %v618
        %621 = vrot.lane.b32.xlu0 %v619, 127
        %v622 = vpop.permute.xlu0 %621
        %v624 = vsel %vm607, %v622, 0.0
        %v625 = vsel %vm509, %v540, 0.0
        %v626 = vsel %vm509, %v541, 0.0
        %v627 = vadd.f32 %v625, %v626
        %v628 = vrot.slane %v627, 4
        %v629 = vadd.f32 %v627, %v628
        %v630 = vrot.slane %v629, 2
        %v631 = vadd.f32 %v629, %v630
        %v632 = vrot.slane %v631, 1
        %v633 = vadd.f32 %v631, %v632
        %635 = vrot.lane.b32.xlu0 %v633, 127
        %v636 = vpop.permute.xlu0 %635
        %v638 = vsel %vm607, %v636, 0.0
        %v640 = vrot.slane %v608, 5
        %v643 = vrot.slane %v624, 4
        %v646 = vrot.slane %v638, 3
        %v648 = vsel %vm316, %v559, %v577
        %vm649 = vcmask 1041408
        %v650 = vsel %vm649, %v648, %v593
        %vm651 = vcmask 1042432
        %v652 = vsel %vm651, %v650, %v640
        %vm653 = vcmask 1043456
        %v654 = vsel %vm653, %v652, %v643
        %vm655 = vcmask 1044480
        %v656 = vsel %vm655, %v654, %v646
        %vm657 = vcmask 128000
        %658 = vst.msk [vmem:[%s271] sm:$0x3f] %vm657, %v656
        %p659 = scmp.lt.s32.totalorder %s20, 1
        %s660 = scalar_select %p659, %s20, 1
        %s661 = smul.addr %s660, 8
        %s662 = scalar_lea.vmem %s3, %s661
        // Predicated region
        $region45: #{tv_loss.1} parent=31 // pred_check
          %p663 = pneg %p116
        $region46: #{tv_loss.1} parent=31 // pred_check_branch
          %665 = sbr.rel (%p663) target = $region48
        $region47: #{tv_loss.1} parent=31 // pred_region
          _
        $region48: #{tv_loss.1} parent=31 // pred_fallthru
          _
      $region32: #{tv_loss.1} parent=5 // pred_fallthru
        _
      %p666 = scmp.le.s32.totalorder 2, %s15
      // Predicated region
      $region49: #{tv_loss.1} parent=5 // pred_check
        %p667 = pneg %p666
      $region50: #{tv_loss.1} parent=5 // pred_check_branch
        %669 = sbr.rel (%p667) target = $region52
      $region51: #{tv_loss.1} parent=5 // pred_region
        %s670 = ssub.s32 %s15, 2
        // Predicated region
        $region53: #{tv_loss.1} parent=51 // pred_check
          %p671 = pneg %p122
        $region54: #{tv_loss.1} parent=51 // pred_check_branch
          %673 = sbr.rel (%p671) target = $region56
        $region55: #{tv_loss.1} parent=51 // pred_region
          %p674 = scmp.lt.s32.totalorder %s21, 1
          %s675 = scalar_select %p674, %s21, 1
          %s676 = smul.addr %s675, 8
          %s677 = scalar_lea.vmem %s3, %s676
        $region56: #{tv_loss.1} parent=51 // pred_fallthru
          _
      $region52: #{tv_loss.1} parent=5 // pred_fallthru
        _
    $region6: #{tv_loss.1} parent=1 // loop_footer
      %s19 = sadd.s32 1, %s15
    $region7: #{tv_loss.1} parent=1 // loop_footer_branch
      %14 = sbr.rel target = $region3
    $region8: #{tv_loss.1} parent=1 // loop_exit
      _
    %678 = vsyncpa [#allocation3], 1
    %s679 = scalar_lea.sflag [#allocation3], 1
    %680 = vsyncpa %s679, 1
    %681 = vsyncpa [#allocation5], 1
    %s682 = scalar_lea.sflag [#allocation5], 1
    %683 = vsyncpa %s682, 1

</llo_original>
